<compile_context>
chip_gen: v7x
topology: tpu7x:2x2x1
jax: 0.10.0
libtpu: 0.0.40
codegen_flags: <defaults>
</compile_context>

<pallas_src>
import functools

import jax
import jax.numpy as jnp
from jax.experimental import pallas as pl
from jax.experimental.pallas import tpu as pltpu

_IN_FEATURES = 784
_HIDDEN = 80
_NUM_CLASSES = 10
_HID_PAD = 128  # hidden 80 -> full 128-lane tile


def _round_up(n, m):
    return ((n + m - 1) // m) * m


def _netfull_kernel(x_ref, w1_ref, b1_ref, w2_ref, b2_ref, o_ref):
    # x_ref:  (TB, 784)        bf16 or f32 (batch-tiled)
    # w1_ref: (784, 128)       bf16 or f32, zero-padded cols 80..127 (resident)
    # b1_ref: (1, 128)   f32   zero-padded (resident)
    # w2_ref: (128, 10)  f32   zero-padded rows 80..127 (resident)
    # b2_ref: (1, 10)    f32   (resident)
    # o_ref:  (TB, 10)   f32

    # layer_one: Linear(784, 80) + Tanh  (bf16/f32 MXU operands, f32 accumulation;
    # padded hidden cols: tanh(0 + 0) = 0 exactly).
    h = jnp.dot(x_ref[...], w1_ref[...], preferred_element_type=jnp.float32)
    h = jnp.tanh(h + b1_ref[...])

    # layer_two: Linear(80, 10)  (zero-padded W2 rows contribute nothing).
    logits = jnp.dot(h, w2_ref[...], preferred_element_type=jnp.float32) + b2_ref[...]

    # Numerically stable log_softmax over dim=1 (exactly 10 real columns, no mask needed).
    m = jnp.max(logits, axis=-1, keepdims=True)
    shifted = logits - m
    lse = jnp.log(jnp.sum(jnp.exp(shifted), axis=-1, keepdims=True))
    o_ref[...] = (shifted - lse).astype(o_ref.dtype)


def pad_params(w1, b1, w2, b2, compute_dtype=jnp.bfloat16):
    """Pad / cast the weights ONCE (hoisted out of the per-call path).

    w1: (784, 80), b1: (1, 80) or (80,), w2: (80, 10), b2: (1, 10) or (10,)
    — i.e. PyTorch nn.Linear weights transposed.  `compute_dtype` applies only to
    the HBM-bandwidth-bound x / W1 stream; everything else stays f32.
    """
    w1p = jnp.zeros((_IN_FEATURES, _HID_PAD), compute_dtype)
    w1p = w1p.at[:, :_HIDDEN].set(w1.astype(compute_dtype))
    b1p = jnp.zeros((1, _HID_PAD), jnp.float32).at[:, :_HIDDEN].set(
        b1.reshape(1, _HIDDEN).astype(jnp.float32))
    w2p = jnp.zeros((_HID_PAD, _NUM_CLASSES), jnp.float32).at[:_HIDDEN, :].set(
        w2.astype(jnp.float32))
    b2p = b2.reshape(1, _NUM_CLASSES).astype(jnp.float32)
    return w1p, b1p, w2p, b2p


def _batch_tile(B, block_b):
    tb = min(block_b, _round_up(B, 8))
    # Give a 2-TensorCore chip (v7x) at least two grid steps to shard across cores.
    if B > 8:
        tb = min(tb, _round_up(pl.cdiv(B, 2), 8))
    return max(_round_up(tb, 8), 8)


@functools.partial(jax.jit, static_argnames=("block_b",))
def netfull_forward(x, padded_params, *, block_b=2048):
    """x: (B, 1, 28, 28) or (B, 784). padded_params: output of pad_params().
    Returns (B, 10) log-probabilities in float32."""
    w1p, b1p, w2p, b2p = padded_params
    compute_dtype = w1p.dtype

    B = x.shape[0]
    x2d = x.reshape(B, -1)
    assert x2d.shape[1] == _IN_FEATURES, "NetFull expects 784 input features"
    if x2d.dtype != compute_dtype:
        # Cast is permitted to fuse into the kernel's input (allow_input_fusion below),
        # so it does not cost an extra x-sized HBM roundtrip.
        x2d = x2d.astype(compute_dtype)

    tb = _batch_tile(B, block_b)
    grid = (pl.cdiv(B, tb),)  # ragged final block; no batch padding, no output slice

    in_itemsize = jnp.dtype(compute_dtype).itemsize
    cost = pl.CostEstimate(
        flops=2 * B * _IN_FEATURES * _HID_PAD + 2 * B * _HID_PAD * _NUM_CLASSES,
        transcendentals=B * (_HID_PAD + _NUM_CLASSES),
        bytes_accessed=(B * _IN_FEATURES * in_itemsize
                        + w1p.size * in_itemsize
                        + (b1p.size + w2p.size + b2p.size) * 4
                        + B * _NUM_CLASSES * 4),
    )

    return pl.pallas_call(
        _netfull_kernel,
        out_shape=jax.ShapeDtypeStruct((B, _NUM_CLASSES), jnp.float32),
        grid=grid,
        in_specs=[
            pl.BlockSpec((tb, _IN_FEATURES), lambda i: (i, 0)),        # x: batch-tiled
            pl.BlockSpec((_IN_FEATURES, _HID_PAD), lambda i: (0, 0)),  # W1: resident
            pl.BlockSpec((1, _HID_PAD), lambda i: (0, 0)),             # b1: resident
            pl.BlockSpec((_HID_PAD, _NUM_CLASSES), lambda i: (0, 0)),  # W2: resident
            pl.BlockSpec((1, _NUM_CLASSES), lambda i: (0, 0)),         # b2: resident
        ],
        out_specs=pl.BlockSpec((tb, _NUM_CLASSES), lambda i: (i, 0)),
        compiler_params=pltpu.CompilerParams(
            dimension_semantics=("parallel",),   # shard batch loop across TCs on v7x
            vmem_limit_bytes=32 << 20,           # safe for 2048-row f32 tiles; <= v7x 64 MiB
            allow_input_fusion=[True, True, True, True, True],
        ),
        cost_estimate=cost,
    )(x2d, w1p, b1p, w2p, b2p)


def init_params(key):
    """Deterministic init mimicking nn.Linear default (uniform +-1/sqrt(fan_in)).
    Weights stored as (in_features, out_features) — PyTorch weight transposed."""
    k1, k2, k3, k4 = jax.random.split(key, 4)
    bound1 = 1.0 / jnp.sqrt(jnp.float32(_IN_FEATURES))
    bound2 = 1.0 / jnp.sqrt(jnp.float32(_HIDDEN))
    w1 = jax.random.uniform(k1, (_IN_FEATURES, _HIDDEN), jnp.float32, -bound1, bound1)
    b1 = jax.random.uniform(k2, (1, _HIDDEN), jnp.float32, -bound1, bound1)
    w2 = jax.random.uniform(k3, (_HIDDEN, _NUM_CLASSES), jnp.float32, -bound2, bound2)
    b2 = jax.random.uniform(k4, (1, _NUM_CLASSES), jnp.float32, -bound2, bound2)
    return w1, b1, w2, b2


def _reference(x, w1, b1, w2, b2):
    x2d = x.reshape(x.shape[0], -1)
    return jax.nn.log_softmax(jnp.tanh(x2d @ w1 + b1) @ w2 + b2, axis=1)


if __name__ == "__main__":
    key = jax.random.PRNGKey(0)
    k_x, k_p = jax.random.split(key)

    # Small MNIST-shaped NCHW batch: (2, 1, 28, 28) -> 784 features.
    x = jax.random.normal(k_x, (2, 1, 28, 28), dtype=jnp.float32)
    w1, b1, w2, b2 = init_params(k_p)
    ref = _reference(x, w1, b1, w2, b2)

    # 1) Default path: bf16 x/W1 stream, f32 MXU accumulation + f32 tanh/log_softmax.
    params_bf16 = pad_params(w1, b1, w2, b2, compute_dtype=jnp.bfloat16)
    out = jax.block_until_ready(netfull_forward(x, params_bf16))
    assert out.shape == (2, _NUM_CLASSES)
    assert jnp.allclose(out, ref, atol=5e-2, rtol=5e-2), "bf16 mismatch vs reference"

    # 2) f32 escape hatch — matches the PyTorch-semantics reference tightly.
    params_f32 = pad_params(w1, b1, w2, b2, compute_dtype=jnp.float32)
    out_f32 = jax.block_until_ready(netfull_forward(x, params_f32))
    assert jnp.allclose(out_f32, ref, atol=1e-5, rtol=1e-5), "f32 mismatch vs reference"

    # 3) Larger, non-tile-multiple batch: exercises the ragged final block, the >=2-step
    #    grid split (2 TC sharding) and pipelining — no wrapper pad, no output slice.
    xb = jax.random.normal(k_x, (1000, 1, 28, 28), dtype=jnp.float32)
    ref_b = _reference(xb, w1, b1, w2, b2)
    out_b = jax.block_until_ready(netfull_forward(xb, params_f32, block_b=512))
    assert out_b.shape == (1000, _NUM_CLASSES)
    assert jnp.allclose(out_b, ref_b, atol=1e-5, rtol=1e-5), "batched mismatch vs reference"

    print("KERNEL_OK")
</pallas_src>

<mosaic_0001>
module attributes {stable_mosaic.version = 11 : i64} {
  func.func @_netfull_kernel(%arg0: i32, %arg1: memref<8x784xbf16, #tpu.memory_space<vmem>>, %arg2: memref<784x128xbf16, #tpu.memory_space<vmem>>, %arg3: memref<1x128xf32, #tpu.memory_space<vmem>>, %arg4: memref<128x10xf32, #tpu.memory_space<vmem>>, %arg5: memref<1x10xf32, #tpu.memory_space<vmem>>, %arg6: memref<8x10xf32, #tpu.memory_space<vmem>>) attributes {dimension_semantics = [#tpu.dimension_semantics<parallel>], iteration_bounds = array<i64: 1>, scalar_prefetch = 0 : i64, scratch_operands = 0 : i64, tpu.core_type = #tpu.core_type<tc>, window_params = [{transform_indices = @transform_0, window_bounds = array<i64: 8, 784>}, {pipeline_mode = #tpu.pipeline_mode<synchronous>, transform_indices = @transform_1, window_bounds = array<i64: 784, 128>}, {pipeline_mode = #tpu.pipeline_mode<synchronous>, transform_indices = @transform_2, window_bounds = array<i64: 1, 128>}, {pipeline_mode = #tpu.pipeline_mode<synchronous>, transform_indices = @transform_3, window_bounds = array<i64: 128, 10>}, {pipeline_mode = #tpu.pipeline_mode<synchronous>, transform_indices = @transform_4, window_bounds = array<i64: 1, 10>}, {transform_indices = @transform_5, window_bounds = array<i64: 8, 10>}]} {
    %c0 = arith.constant 0 : index
    %c0_0 = arith.constant 0 : index
    %0 = vector.load %arg1[%c0, %c0_0] : memref<8x784xbf16, #tpu.memory_space<vmem>>, vector<8x784xbf16>
    %c0_1 = arith.constant 0 : index
    %c0_2 = arith.constant 0 : index
    %1 = vector.load %arg2[%c0_1, %c0_2] : memref<784x128xbf16, #tpu.memory_space<vmem>>, vector<784x128xbf16>
    %cst = arith.constant dense<0.000000e+00> : vector<8x128xf32>
    %2 = tpu.matmul %0, %1, %cst {dimension_numbers = #tpu.dot_dimension_numbers<[1], [0], [0], [1], [0, 0, 1, 1], [], []>} : vector<8x784xbf16>, vector<784x128xbf16>, vector<8x128xf32> -> vector<8x128xf32>
    %c0_3 = arith.constant 0 : index
    %c0_4 = arith.constant 0 : index
    %3 = vector.load %arg3[%c0_3, %c0_4] : memref<1x128xf32, #tpu.memory_space<vmem>>, vector<1x128xf32>
    %4 = vector.broadcast %3 : vector<1x128xf32> to vector<8x128xf32>
    %5 = arith.addf %2, %4 : vector<8x128xf32>
    %6 = math.tanh %5 : vector<8x128xf32>
    %c0_5 = arith.constant 0 : index
    %c0_6 = arith.constant 0 : index
    %7 = vector.load %arg4[%c0_5, %c0_6] : memref<128x10xf32, #tpu.memory_space<vmem>>, vector<128x10xf32>
    %cst_7 = arith.constant dense<0.000000e+00> : vector<8x10xf32>
    %8 = tpu.matmul %6, %7, %cst_7 {dimension_numbers = #tpu.dot_dimension_numbers<[1], [0], [0], [1], [0, 0, 1, 1], [], []>} : vector<8x128xf32>, vector<128x10xf32>, vector<8x10xf32> -> vector<8x10xf32>
    %c0_8 = arith.constant 0 : index
    %c0_9 = arith.constant 0 : index
    %9 = vector.load %arg5[%c0_8, %c0_9] : memref<1x10xf32, #tpu.memory_space<vmem>>, vector<1x10xf32>
    %10 = vector.broadcast %9 : vector<1x10xf32> to vector<8x10xf32>
    %11 = arith.addf %8, %10 : vector<8x10xf32>
    %cst_10 = arith.constant dense<0xFF800000> : vector<8xf32>
    %12 = vector.multi_reduction <maximumf>, %11, %cst_10 [1] : vector<8x10xf32> to vector<8xf32>
    %13 = vector.shape_cast %12 : vector<8xf32> to vector<8x1xf32>
    %14 = vector.broadcast %13 : vector<8x1xf32> to vector<8x10xf32>
    %15 = arith.subf %11, %14 : vector<8x10xf32>
    %16 = math.exp %15 : vector<8x10xf32>
    %cst_11 = arith.constant dense<0.000000e+00> : vector<8xf32>
    %17 = vector.multi_reduction <add>, %16, %cst_11 [1] : vector<8x10xf32> to vector<8xf32>
    %18 = vector.shape_cast %17 : vector<8xf32> to vector<8x1xf32>
    %19 = math.log %18 : vector<8x1xf32>
    %20 = vector.broadcast %19 : vector<8x1xf32> to vector<8x10xf32>
    %21 = arith.subf %15, %20 : vector<8x10xf32>
    %c0_12 = arith.constant 0 : index
    %c0_13 = arith.constant 0 : index
    %22 = vector.load %arg6[%c0_12, %c0_13] : memref<8x10xf32, #tpu.memory_space<vmem>>, vector<8x10xf32>
    tpu.vector_store %arg6[%c0_12, %c0_13], %21 {strides = array<i32>} : memref<8x10xf32, #tpu.memory_space<vmem>>, vector<8x10xf32>,
    return
  }
  func.func @transform_0(%arg0: i32) -> (i32, i32) {
    %c0_i32 = arith.constant 0 : i32
    %c0_i32_0 = arith.constant 0 : i32
    return %arg0, %c0_i32 : i32, i32
  }
  func.func @transform_1(%arg0: i32) -> (i32, i32) {
    %c0_i32 = arith.constant 0 : i32
    %c0_i32_0 = arith.constant 0 : i32
    %c0_i32_1 = arith.constant 0 : i32
    return %c0_i32, %c0_i32_0 : i32, i32
  }
  func.func @transform_2(%arg0: i32) -> (i32, i32) {
    %c0_i32 = arith.constant 0 : i32
    %c0_i32_0 = arith.constant 0 : i32
    %c0_i32_1 = arith.constant 0 : i32
    return %c0_i32, %c0_i32_0 : i32, i32
  }
  func.func @transform_3(%arg0: i32) -> (i32, i32) {
    %c0_i32 = arith.constant 0 : i32
    %c0_i32_0 = arith.constant 0 : i32
    %c0_i32_1 = arith.constant 0 : i32
    return %c0_i32, %c0_i32_0 : i32, i32
  }
  func.func @transform_4(%arg0: i32) -> (i32, i32) {
    %c0_i32 = arith.constant 0 : i32
    %c0_i32_0 = arith.constant 0 : i32
    %c0_i32_1 = arith.constant 0 : i32
    return %c0_i32, %c0_i32_0 : i32, i32
  }
  func.func @transform_5(%arg0: i32) -> (i32, i32) {
    %c0_i32 = arith.constant 0 : i32
    %c0_i32_0 = arith.constant 0 : i32
    return %arg0, %c0_i32 : i32, i32
  }
}

</mosaic_0001>

<llo_original>
// kernel: netfull_forward.1
$region0: #{netfull_forward.1}
  #allocation0 [shape = 'u32[]', space=smem, size = 0x4, offset = 0x4, fixed_abs, tag = 'smem constant byte address 0x4 - core index']
  #allocation1 [shape = 'u32[144,128]{1,0:T(1,128)}', space=vmem, size = 0x12000, scoped, tag = 'internal scratch']
  %s0 = inlined_call_operand.vmem [shape: bf16[2,784], index: 0, kind: input, shape index: {}]
  %s1 = inlined_call_operand.hbm [shape: bf16[784,128], index: 1, kind: input, shape index: {}]
  %s2 = inlined_call_operand.vmem [shape: f32[1,128], index: 2, kind: input, shape index: {}]
  %s3 = inlined_call_operand.vmem [shape: f32[128,10], index: 3, kind: input, shape index: {}]
  %s4 = inlined_call_operand.vmem [shape: f32[1,10], index: 4, kind: input, shape index: {}]
  %s5 = inlined_call_operand.hbm [shape: f32[2,10], index: 5, kind: output, shape index: {}]
  %s6 = sld [smem:[#allocation0]]
  $region34: #{netfull_forward.1} parent=0
    _
  %s8 = ssub.s32 1, %s6
  %s9 = scalar_select 0, %s8, %s6
  $region1: #{netfull_forward.1} parent=0
    #allocation2 [shape = 'u8[200704]{0}', space=vmem, size = 0x31000, scoped, tag = 'input window, operand 1, single buffered']
    #allocation3 [shape = 's32[1]{0}', space=sflag, size = 0x4, scoped, tag = 'scoped memory for netfull_forward.1']
    #allocation4 [shape = 's32[1]{0}', space=sflag, size = 0x4, scoped, tag = 'scoped memory for netfull_forward.1']
    #allocation5 [shape = 'u8[4096]{0}', space=vmem, size = 0x1000, scoped, tag = 'output window, operand 0, single buffered']
    %10 = vsyncpa [#allocation3], 0
    %11 = vsyncpa [#allocation4], 0
    // Predicated region
    $region2: #{netfull_forward.1} parent=1 // pred_check
      _
    $region3: #{netfull_forward.1} parent=1 // pred_check_branch
      %13 = sbr.rel (0) target = $region5
    $region4: #{netfull_forward.1} parent=1 // pred_region
      _
    $region5: #{netfull_forward.1} parent=1 // pred_fallthru
      _
    // Predicated region
    $region6: #{netfull_forward.1} parent=1 // pred_check
      _
    $region7: #{netfull_forward.1} parent=1 // pred_check_branch
      %15 = sbr.rel (0) target = $region9
    $region8: #{netfull_forward.1} parent=1 // pred_region
      %s17 = ssub.s32 6272, 6272
      %18 = vsyncadd [#allocation3], %s17
      %s19 = sshll.u32 [#allocation2], 4
      %s20 = int_to_ptr.vmem [resolvable:$true] %s19
      %25 = dma.hbm_to_vmem [thread:$0]  %s1, 6272, %s20, [#allocation3], 64, 64, 4
    $region9: #{netfull_forward.1} parent=1 // pred_fallthru
      _
    // Predicated region
    $region10: #{netfull_forward.1} parent=1 // pred_check
      _
    $region11: #{netfull_forward.1} parent=1 // pred_check_branch
      %27 = sbr.rel (0) target = $region13
    $region12: #{netfull_forward.1} parent=1 // pred_region
      _
    $region13: #{netfull_forward.1} parent=1 // pred_fallthru
      _
    // Predicated region
    $region14: #{netfull_forward.1} parent=1 // pred_check
      _
    $region15: #{netfull_forward.1} parent=1 // pred_check_branch
      %29 = sbr.rel (0) target = $region17
    $region16: #{netfull_forward.1} parent=1 // pred_region
      _
    $region17: #{netfull_forward.1} parent=1 // pred_fallthru
      _
    // Predicated region
    $region18: #{netfull_forward.1} parent=1 // pred_check
      _
    $region19: #{netfull_forward.1} parent=1 // pred_check_branch
      %31 = sbr.rel (0) target = $region21
    $region20: #{netfull_forward.1} parent=1 // pred_region
      _
    $region21: #{netfull_forward.1} parent=1 // pred_fallthru
      _
    // Predicated region
    $region22: #{netfull_forward.1} parent=1 // pred_check
      _
    $region23: #{netfull_forward.1} parent=1 // pred_check_branch
      %33 = sbr.rel (0) target = $region25
    $region24: #{netfull_forward.1} parent=1 // pred_region
      %34 = dma.done [#allocation3], 6272
    $region25: #{netfull_forward.1} parent=1 // pred_fallthru
      _
    %v36 = vld [vmem:[%s0] sm:$0x7f]
    %v37 = vld [vmem:[%s0 + $0x7] sm:$0x7f]
    %v38 = vld [vmem:[%s0 + $0xe] sm:$0x7f]
    %v39 = vld [vmem:[%s0 + $0x15] sm:$0x7f]
    %v40 = vld [vmem:[#allocation2] sm:$0xf]
    %v41 = vld [vmem:[#allocation2 + $0x4] sm:$0xf]
    %v42 = vld [vmem:[#allocation2 + $0x8] sm:$0xf]
    %v43 = vld [vmem:[#allocation2 + $0xc] sm:$0xf]
    %v44 = vld [vmem:[#allocation2 + $0x10] sm:$0xf]
    %v45 = vld [vmem:[#allocation2 + $0x14] sm:$0xf]
    %v46 = vld [vmem:[#allocation2 + $0x18] sm:$0xf]
    %v47 = vld [vmem:[#allocation2 + $0x1c] sm:$0xf]
    %v48 = vld [vmem:[#allocation2 + $0x20] sm:$0xf]
    %v49 = vld [vmem:[#allocation2 + $0x24] sm:$0xf]
    %v50 = vld [vmem:[#allocation2 + $0x28] sm:$0xf]
    %v51 = vld [vmem:[#allocation2 + $0x2c] sm:$0xf]
    %v52 = vld [vmem:[#allocation2 + $0x30] sm:$0xf]
    %v53 = vld [vmem:[#allocation2 + $0x34] sm:$0xf]
    %v54 = vld [vmem:[#allocation2 + $0x38] sm:$0xf]
    %v55 = vld [vmem:[#allocation2 + $0x3c] sm:$0xf]
    %v56 = vld [vmem:[#allocation2 + $0x40] sm:$0xf]
    %v57 = vld [vmem:[#allocation2 + $0x44] sm:$0xf]
    %v58 = vld [vmem:[#allocation2 + $0x48] sm:$0xf]
    %v59 = vld [vmem:[#allocation2 + $0x4c] sm:$0xf]
    %v60 = vld [vmem:[#allocation2 + $0x50] sm:$0xf]
    %v61 = vld [vmem:[#allocation2 + $0x54] sm:$0xf]
    %v62 = vld [vmem:[#allocation2 + $0x58] sm:$0xf]
    %v63 = vld [vmem:[#allocation2 + $0x5c] sm:$0xf]
    %v64 = vld [vmem:[#allocation2 + $0x60] sm:$0xf]
    %v65 = vld [vmem:[#allocation2 + $0x64] sm:$0xf]
    %v66 = vld [vmem:[#allocation2 + $0x68] sm:$0xf]
    %v67 = vld [vmem:[#allocation2 + $0x6c] sm:$0xf]
    %v68 = vld [vmem:[#allocation2 + $0x70] sm:$0xf]
    %v69 = vld [vmem:[#allocation2 + $0x74] sm:$0xf]
    %v70 = vld [vmem:[#allocation2 + $0x78] sm:$0xf]
    %v71 = vld [vmem:[#allocation2 + $0x7c] sm:$0xf]
    %v72 = vld [vmem:[#allocation2 + $0x80] sm:$0xf]
    %v73 = vld [vmem:[#allocation2 + $0x84] sm:$0xf]
    %v74 = vld [vmem:[#allocation2 + $0x88] sm:$0xf]
    %v75 = vld [vmem:[#allocation2 + $0x8c] sm:$0xf]
    %v76 = vld [vmem:[#allocation2 + $0x90] sm:$0xf]
    %v77 = vld [vmem:[#allocation2 + $0x94] sm:$0xf]
    %v78 = vld [vmem:[#allocation2 + $0x98] sm:$0xf]
    %v79 = vld [vmem:[#allocation2 + $0x9c] sm:$0xf]
    %v80 = vld [vmem:[#allocation2 + $0xa0] sm:$0xf]
    %v81 = vld [vmem:[#allocation2 + $0xa4] sm:$0xf]
    %v82 = vld [vmem:[#allocation2 + $0xa8] sm:$0xf]
    %v83 = vld [vmem:[#allocation2 + $0xac] sm:$0xf]
    %v84 = vld [vmem:[#allocation2 + $0xb0] sm:$0xf]
    %v85 = vld [vmem:[#allocation2 + $0xb4] sm:$0xf]
    %v86 = vld [vmem:[#allocation2 + $0xb8] sm:$0xf]
    %v87 = vld [vmem:[#allocation2 + $0xbc] sm:$0xf]
    %v88 = vld [vmem:[#allocation2 + $0xc0] sm:$0xf]
    %v89 = vld [vmem:[#allocation2 + $0xc4] sm:$0xf]
    %v90 = vld [vmem:[#allocation2 + $0xc8] sm:$0xf]
    %v91 = vld [vmem:[#allocation2 + $0xcc] sm:$0xf]
    %v92 = vld [vmem:[#allocation2 + $0xd0] sm:$0xf]
    %v93 = vld [vmem:[#allocation2 + $0xd4] sm:$0xf]
    %v94 = vld [vmem:[#allocation2 + $0xd8] sm:$0xf]
    %v95 = vld [vmem:[#allocation2 + $0xdc] sm:$0xf]
    %v96 = vld [vmem:[#allocation2 + $0xe0] sm:$0xf]
    %v97 = vld [vmem:[#allocation2 + $0xe4] sm:$0xf]
    %v98 = vld [vmem:[#allocation2 + $0xe8] sm:$0xf]
    %v99 = vld [vmem:[#allocation2 + $0xec] sm:$0xf]
    %v100 = vld [vmem:[#allocation2 + $0xf0] sm:$0xf]
    %v101 = vld [vmem:[#allocation2 + $0xf4] sm:$0xf]
    %v102 = vld [vmem:[#allocation2 + $0xf8] sm:$0xf]
    %v103 = vld [vmem:[#allocation2 + $0xfc] sm:$0xf]
    %v104 = vld [vmem:[#allocation2 + $0x100] sm:$0xf]
    %v105 = vld [vmem:[#allocation2 + $0x104] sm:$0xf]
    %v106 = vld [vmem:[#allocation2 + $0x108] sm:$0xf]
    %v107 = vld [vmem:[#allocation2 + $0x10c] sm:$0xf]
    %v108 = vld [vmem:[#allocation2 + $0x110] sm:$0xf]
    %v109 = vld [vmem:[#allocation2 + $0x114] sm:$0xf]
    %v110 = vld [vmem:[#allocation2 + $0x118] sm:$0xf]
    %v111 = vld [vmem:[#allocation2 + $0x11c] sm:$0xf]
    %v112 = vld [vmem:[#allocation2 + $0x120] sm:$0xf]
    %v113 = vld [vmem:[#allocation2 + $0x124] sm:$0xf]
    %v114 = vld [vmem:[#allocation2 + $0x128] sm:$0xf]
    %v115 = vld [vmem:[#allocation2 + $0x12c] sm:$0xf]
    %v116 = vld [vmem:[#allocation2 + $0x130] sm:$0xf]
    %v117 = vld [vmem:[#allocation2 + $0x134] sm:$0xf]
    %v118 = vld [vmem:[#allocation2 + $0x138] sm:$0xf]
    %v119 = vld [vmem:[#allocation2 + $0x13c] sm:$0xf]
    %v120 = vld [vmem:[#allocation2 + $0x140] sm:$0xf]
    %v121 = vld [vmem:[#allocation2 + $0x144] sm:$0xf]
    %v122 = vld [vmem:[#allocation2 + $0x148] sm:$0xf]
    %v123 = vld [vmem:[#allocation2 + $0x14c] sm:$0xf]
    %v124 = vld [vmem:[#allocation2 + $0x150] sm:$0xf]
    %v125 = vld [vmem:[#allocation2 + $0x154] sm:$0xf]
    %v126 = vld [vmem:[#allocation2 + $0x158] sm:$0xf]
    %v127 = vld [vmem:[#allocation2 + $0x15c] sm:$0xf]
    %v128 = vld [vmem:[#allocation2 + $0x160] sm:$0xf]
    %v129 = vld [vmem:[#allocation2 + $0x164] sm:$0xf]
    %v130 = vld [vmem:[#allocation2 + $0x168] sm:$0xf]
    %v131 = vld [vmem:[#allocation2 + $0x16c] sm:$0xf]
    %v132 = vld [vmem:[#allocation2 + $0x170] sm:$0xf]
    %v133 = vld [vmem:[#allocation2 + $0x174] sm:$0xf]
    %v134 = vld [vmem:[#allocation2 + $0x178] sm:$0xf]
    %v135 = vld [vmem:[#allocation2 + $0x17c] sm:$0xf]
    %v136 = vld [vmem:[#allocation2 + $0x180] sm:$0xf]
    %v137 = vld [vmem:[#allocation2 + $0x184] sm:$0xf]
    %v138 = vld [vmem:[%s2] sm:$0x1]
    %v140 = vlaneseq
    %v141 = vshrl.u32 %v140, 7
    %v142 = vsub.s32 0, %v141
    %v143 = vrot.slane %v138, %v142
    %v149 = vcombine.low %v36, %v37
    %v150 = vcombine.high %v36, %v37
    %v151 = vcombine.low %v38, %v39
    %v152 = vcombine.high %v38, %v39
    %v154 = vunpack.c.l.s4 1966171168
    %v155 = vunpack.c.0.s8 %v154
    %v156 = vlaneseq
    %v157 = vshrl.u32 %v156, 7
    %v158 = vsub.s32 %v155, %v157
    %v159 = vrot.slane %v149, %v158
    %v161 = vunpack.c.l.s4 1966171168
    %v162 = vunpack.c.0.s8 %v161
    %v163 = vlaneseq
    %v164 = vshrl.u32 %v163, 7
    %v165 = vsub.s32 %v162, %v164
    %v166 = vrot.slane %v150, %v165
    %v168 = vunpack.c.l.s4 1966171168
    %v169 = vunpack.c.0.s8 %v168
    %v170 = vlaneseq
    %v171 = vshrl.u32 %v170, 7
    %v172 = vsub.s32 %v169, %v171
    %v173 = vrot.slane %v151, %v172
    %v175 = vunpack.c.l.s4 1966171168
    %v176 = vunpack.c.0.s8 %v175
    %v177 = vlaneseq
    %v178 = vshrl.u32 %v177, 7
    %v179 = vsub.s32 %v176, %v178
    %v180 = vrot.slane %v152, %v179
    %v181 = vcombine.low %v159, %v173
    %v182 = vcombine.high %v159, %v173
    %v183 = vcombine.low %v166, %v180
    %v184 = vcombine.high %v166, %v180
    %v186 = vunpack.c.l.s4 1966171168
    %v187 = vunpack.c.0.s8 %v186
    %v188 = vlaneseq
    %v189 = vshrl.u32 %v188, 7
    %v190 = vsub.s32 %v187, %v189
    %v191 = vrot.slane %v181, %v190
    %v193 = vunpack.c.l.s4 1966171168
    %v194 = vunpack.c.0.s8 %v193
    %v195 = vlaneseq
    %v196 = vshrl.u32 %v195, 7
    %v197 = vsub.s32 %v194, %v196
    %v198 = vrot.slane %v183, %v197
    %v200 = vunpack.c.l.s4 1966171168
    %v201 = vunpack.c.0.s8 %v200
    %v202 = vlaneseq
    %v203 = vshrl.u32 %v202, 7
    %v204 = vsub.s32 %v201, %v203
    %v205 = vrot.slane %v182, %v204
    %v207 = vunpack.c.l.s4 1966171168
    %v208 = vunpack.c.0.s8 %v207
    %v209 = vlaneseq
    %v210 = vshrl.u32 %v209, 7
    %v211 = vsub.s32 %v208, %v210
    %v212 = vrot.slane %v184, %v211
    %v213 = vcombine.high %v191, %v191
    %v214 = vcombine.high %v198, %v198
    %v215 = vcombine.high %v205, %v205
    %v320 = vunpack.c.l.b16 %v40
    %v321 = vunpack.c.l.b16 %v41
    %v322 = vunpack.c.l.b16 %v42
    %v323 = vunpack.c.l.b16 %v43
    %v324 = vunpack.c.l.b16 %v44
    %v325 = vunpack.c.l.b16 %v45
    %v326 = vunpack.c.l.b16 %v46
    %v327 = vunpack.c.l.b16 %v47
    %v328 = vunpack.c.l.b16 %v48
    %v329 = vunpack.c.l.b16 %v49
    %v330 = vunpack.c.l.b16 %v50
    %v331 = vunpack.c.l.b16 %v51
    %v332 = vunpack.c.l.b16 %v52
    %v333 = vunpack.c.l.b16 %v53
    %v334 = vunpack.c.l.b16 %v54
    %v335 = vunpack.c.l.b16 %v55
    %v336 = vunpack.c.l.b16 %v56
    %v337 = vunpack.c.l.b16 %v57
    %v338 = vunpack.c.l.b16 %v58
    %v339 = vunpack.c.l.b16 %v59
    %v340 = vunpack.c.l.b16 %v60
    %v341 = vunpack.c.l.b16 %v61
    %v342 = vunpack.c.l.b16 %v62
    %v343 = vunpack.c.l.b16 %v63
    %v344 = vunpack.c.l.b16 %v64
    %v345 = vunpack.c.l.b16 %v65
    %v346 = vunpack.c.l.b16 %v66
    %v347 = vunpack.c.l.b16 %v67
    %v348 = vunpack.c.l.b16 %v68
    %v349 = vunpack.c.l.b16 %v69
    %v350 = vunpack.c.l.b16 %v70
    %v351 = vunpack.c.l.b16 %v71
    %v352 = vunpack.c.l.b16 %v72
    %v353 = vunpack.c.l.b16 %v73
    %v354 = vunpack.c.l.b16 %v74
    %v355 = vunpack.c.l.b16 %v75
    %v356 = vunpack.c.l.b16 %v76
    %v357 = vunpack.c.l.b16 %v77
    %v358 = vunpack.c.l.b16 %v78
    %v359 = vunpack.c.l.b16 %v79
    %v360 = vunpack.c.l.b16 %v80
    %v361 = vunpack.c.l.b16 %v81
    %v362 = vunpack.c.l.b16 %v82
    %v363 = vunpack.c.l.b16 %v83
    %v364 = vunpack.c.l.b16 %v84
    %v365 = vunpack.c.l.b16 %v85
    %v366 = vunpack.c.l.b16 %v86
    %v367 = vunpack.c.l.b16 %v87
    %v368 = vunpack.c.l.b16 %v88
    %v369 = vunpack.c.l.b16 %v89
    %v370 = vunpack.c.l.b16 %v90
    %v371 = vunpack.c.l.b16 %v91
    %v372 = vunpack.c.l.b16 %v92
    %v373 = vunpack.c.l.b16 %v93
    %v374 = vunpack.c.l.b16 %v94
    %v375 = vunpack.c.l.b16 %v95
    %v376 = vunpack.c.l.b16 %v96
    %v377 = vunpack.c.l.b16 %v97
    %v378 = vunpack.c.l.b16 %v98
    %v379 = vunpack.c.l.b16 %v99
    %v380 = vunpack.c.l.b16 %v100
    %v381 = vunpack.c.l.b16 %v101
    %v382 = vunpack.c.l.b16 %v102
    %v383 = vunpack.c.l.b16 %v103
    %v384 = vunpack.c.l.b16 %v104
    %v385 = vunpack.c.l.b16 %v105
    %v386 = vunpack.c.l.b16 %v106
    %v387 = vunpack.c.l.b16 %v107
    %v388 = vunpack.c.l.b16 %v108
    %v389 = vunpack.c.l.b16 %v109
    %v390 = vunpack.c.l.b16 %v110
    %v391 = vunpack.c.l.b16 %v111
    %v392 = vunpack.c.l.b16 %v112
    %v393 = vunpack.c.l.b16 %v113
    %v394 = vunpack.c.l.b16 %v114
    %v395 = vunpack.c.l.b16 %v115
    %v396 = vunpack.c.l.b16 %v116
    %v397 = vunpack.c.l.b16 %v117
    %v398 = vunpack.c.l.b16 %v118
    %v399 = vunpack.c.l.b16 %v119
    %v400 = vunpack.c.l.b16 %v120
    %v401 = vunpack.c.l.b16 %v121
    %v402 = vunpack.c.l.b16 %v122
    %v403 = vunpack.c.l.b16 %v123
    %v404 = vunpack.c.l.b16 %v124
    %v405 = vunpack.c.l.b16 %v125
    %v406 = vunpack.c.l.b16 %v126
    %v407 = vunpack.c.l.b16 %v127
    %v408 = vunpack.c.l.b16 %v128
    %v409 = vunpack.c.l.b16 %v129
    %v410 = vunpack.c.l.b16 %v130
    %v411 = vunpack.c.l.b16 %v131
    %v412 = vunpack.c.l.b16 %v132
    %v413 = vunpack.c.l.b16 %v133
    %v414 = vunpack.c.l.b16 %v134
    %v415 = vunpack.c.l.b16 %v135
    %v416 = vunpack.c.l.b16 %v136
    %v417 = vunpack.c.l.b16 %v137
    %v418 = vpack.c.b16 %v321, %v320
    %v419 = vpack.c.b16 %v323, %v322
    %v420 = vpack.c.b16 %v325, %v324
    %v421 = vpack.c.b16 %v327, %v326
    %v422 = vpack.c.b16 %v329, %v328
    %v423 = vpack.c.b16 %v331, %v330
    %v424 = vpack.c.b16 %v333, %v332
    %v425 = vpack.c.b16 %v335, %v334
    %v426 = vpack.c.b16 %v337, %v336
    %v427 = vpack.c.b16 %v339, %v338
    %v428 = vpack.c.b16 %v341, %v340
    %v429 = vpack.c.b16 %v343, %v342
    %v430 = vpack.c.b16 %v345, %v344
    %v431 = vpack.c.b16 %v347, %v346
    %v432 = vpack.c.b16 %v349, %v348
    %v433 = vpack.c.b16 %v351, %v350
    %v434 = vpack.c.b16 %v353, %v352
    %v435 = vpack.c.b16 %v355, %v354
    %v436 = vpack.c.b16 %v357, %v356
    %v437 = vpack.c.b16 %v359, %v358
    %v438 = vpack.c.b16 %v361, %v360
    %v439 = vpack.c.b16 %v363, %v362
    %v440 = vpack.c.b16 %v365, %v364
    %v441 = vpack.c.b16 %v367, %v366
    %v442 = vpack.c.b16 %v369, %v368
    %v443 = vpack.c.b16 %v371, %v370
    %v444 = vpack.c.b16 %v373, %v372
    %v445 = vpack.c.b16 %v375, %v374
    %v446 = vpack.c.b16 %v377, %v376
    %v447 = vpack.c.b16 %v379, %v378
    %v448 = vpack.c.b16 %v381, %v380
    %v449 = vpack.c.b16 %v383, %v382
    %v450 = vpack.c.b16 %v385, %v384
    %v451 = vpack.c.b16 %v387, %v386
    %v452 = vpack.c.b16 %v389, %v388
    %v453 = vpack.c.b16 %v391, %v390
    %v454 = vpack.c.b16 %v393, %v392
    %v455 = vpack.c.b16 %v395, %v394
    %v456 = vpack.c.b16 %v397, %v396
    %v457 = vpack.c.b16 %v399, %v398
    %v458 = vpack.c.b16 %v401, %v400
    %v459 = vpack.c.b16 %v403, %v402
    %v460 = vpack.c.b16 %v405, %v404
    %v461 = vpack.c.b16 %v407, %v406
    %v462 = vpack.c.b16 %v409, %v408
    %v463 = vpack.c.b16 %v411, %v410
    %v464 = vpack.c.b16 %v413, %v412
    %v465 = vpack.c.b16 %v415, %v414
    %v466 = vpack.c.b16 %v417, %v416
    %vm516 = vcmask 130048
    %v518 = vsel %vm516, %v214, 0
    %520 = vmatprep.subr.bf16.mxu0 0
    %521 = vmatpush1.bf16.msra.mxu0 %v418
    %522 = vmatprep.subr.bf16.mxu0 0
    %523 = vmatpush1.bf16.msra.mxu0 %v419
    %524 = vmatprep.subr.bf16.mxu0 0
    %525 = vmatpush1.bf16.msra.mxu0 %v420
    %526 = vmatprep.subr.bf16.mxu0 0
    %527 = vmatpush1.bf16.msra.mxu0 %v421
    %528 = vmatprep.subr.bf16.mxu0 0
    %529 = vmatpush1.bf16.msra.mxu0 %v422
    %530 = vmatprep.subr.bf16.mxu0 0
    %531 = vmatpush1.bf16.msra.mxu0 %v423
    %532 = vmatprep.subr.bf16.mxu0 0
    %533 = vmatpush1.bf16.msra.mxu0 %v424
    %534 = vmatprep.subr.bf16.mxu0 0
    %535 = vmatpush1.bf16.msra.mxu0 %v425
    %536 = vmatprep.subr.bf16.mxu0 0
    %537 = vmatpush1.bf16.msra.mxu0 %v426
    %538 = vmatprep.subr.bf16.mxu0 0
    %539 = vmatpush1.bf16.msra.mxu0 %v427
    %540 = vmatprep.subr.bf16.mxu0 0
    %541 = vmatpush1.bf16.msra.mxu0 %v428
    %542 = vmatprep.subr.bf16.mxu0 0
    %543 = vmatpush1.bf16.msra.mxu0 %v429
    %544 = vmatprep.subr.bf16.mxu0 0
    %545 = vmatpush1.bf16.msra.mxu0 %v430
    %546 = vmatprep.subr.bf16.mxu0 0
    %547 = vmatpush1.bf16.msra.mxu0 %v431
    %548 = vmatprep.subr.bf16.mxu0 0
    %549 = vmatpush1.bf16.msra.mxu0 %v432
    %550 = vmatprep.subr.bf16.mxu0 0
    %551 = vmatpush1.bf16.msra.mxu0 %v433
    %552 = vmatprep.mubr.bf16.mxu0 %v205
    %553 = vmatmul.mubr.bf16.gmra.mrb[0].mxu0 %v191
    %v554 = vpop.f32.mrb[0].mxu0
    %v555 = vadd.f32 %v143, %v554
    %v556 = vpop.f32.mrb[0].mxu0
    %v557 = vpop.f32.mrb[0].mxu0
    %v558 = vpop.f32.mrb[0].mxu0
    %559 = vdwg.mxu0
    %560 = vmatprep.subr.bf16.mxu0 0
    %561 = vmatpush1.bf16.msra.mxu0 %v434
    %562 = vmatprep.subr.bf16.mxu0 0
    %563 = vmatpush1.bf16.msra.mxu0 %v435
    %564 = vmatprep.subr.bf16.mxu0 0
    %565 = vmatpush1.bf16.msra.mxu0 %v436
    %566 = vmatprep.subr.bf16.mxu0 0
    %567 = vmatpush1.bf16.msra.mxu0 %v437
    %568 = vmatprep.subr.bf16.mxu0 0
    %569 = vmatpush1.bf16.msra.mxu0 %v438
    %570 = vmatprep.subr.bf16.mxu0 0
    %571 = vmatpush1.bf16.msra.mxu0 %v439
    %572 = vmatprep.subr.bf16.mxu0 0
    %573 = vmatpush1.bf16.msra.mxu0 %v440
    %574 = vmatprep.subr.bf16.mxu0 0
    %575 = vmatpush1.bf16.msra.mxu0 %v441
    %576 = vmatprep.subr.bf16.mxu0 0
    %577 = vmatpush1.bf16.msra.mxu0 %v442
    %578 = vmatprep.subr.bf16.mxu0 0
    %579 = vmatpush1.bf16.msra.mxu0 %v443
    %580 = vmatprep.subr.bf16.mxu0 0
    %581 = vmatpush1.bf16.msra.mxu0 %v444
    %582 = vmatprep.subr.bf16.mxu0 0
    %583 = vmatpush1.bf16.msra.mxu0 %v445
    %584 = vmatprep.subr.bf16.mxu0 0
    %585 = vmatpush1.bf16.msra.mxu0 %v446
    %586 = vmatprep.subr.bf16.mxu0 0
    %587 = vmatpush1.bf16.msra.mxu0 %v447
    %588 = vmatprep.subr.bf16.mxu0 0
    %589 = vmatpush1.bf16.msra.mxu0 %v448
    %590 = vmatprep.subr.bf16.mxu0 0
    %591 = vmatpush1.bf16.msra.mxu0 %v449
    %592 = vmatprep.mubr.bf16.mxu0 %v215
    %593 = vmatmul.mubr.bf16.gmra.mrb[0].mxu0 %v213
    %v594 = vpop.f32.mrb[0].mxu0
    %v595 = vadd.f32 %v555, %v594
    %v596 = vpop.f32.mrb[0].mxu0
    %v597 = vpop.f32.mrb[0].mxu0
    %v598 = vpop.f32.mrb[0].mxu0
    %599 = vdwg.mxu0
    %600 = vmatprep.subr.bf16.mxu0 0
    %601 = vmatpush1.bf16.msra.mxu0 %v450
    %602 = vmatprep.subr.bf16.mxu0 0
    %603 = vmatpush1.bf16.msra.mxu0 %v451
    %604 = vmatprep.subr.bf16.mxu0 0
    %605 = vmatpush1.bf16.msra.mxu0 %v452
    %606 = vmatprep.subr.bf16.mxu0 0
    %607 = vmatpush1.bf16.msra.mxu0 %v453
    %608 = vmatprep.subr.bf16.mxu0 0
    %609 = vmatpush1.bf16.msra.mxu0 %v454
    %610 = vmatprep.subr.bf16.mxu0 0
    %611 = vmatpush1.bf16.msra.mxu0 %v455
    %612 = vmatprep.subr.bf16.mxu0 0
    %613 = vmatpush1.bf16.msra.mxu0 %v456
    %614 = vmatprep.subr.bf16.mxu0 0
    %615 = vmatpush1.bf16.msra.mxu0 %v457
    %616 = vmatprep.subr.bf16.mxu0 0
    %617 = vmatpush1.bf16.msra.mxu0 %v458
    %618 = vmatprep.subr.bf16.mxu0 0
    %619 = vmatpush1.bf16.msra.mxu0 %v459
    %620 = vmatprep.subr.bf16.mxu0 0
    %621 = vmatpush1.bf16.msra.mxu0 %v460
    %622 = vmatprep.subr.bf16.mxu0 0
    %623 = vmatpush1.bf16.msra.mxu0 %v461
    %624 = vmatprep.subr.bf16.mxu0 0
    %625 = vmatpush1.bf16.msra.mxu0 %v462
    %626 = vmatprep.subr.bf16.mxu0 0
    %627 = vmatpush1.bf16.msra.mxu0 %v463
    %628 = vmatprep.subr.bf16.mxu0 0
    %629 = vmatpush1.bf16.msra.mxu0 %v464
    %630 = vmatprep.subr.bf16.mxu0 0
    %631 = vmatpush1.bf16.msra.mxu0 %v465
    %632 = vmatprep.mubr.bf16.mxu0 %v212
    %633 = vmatmul.mubr.bf16.gmra.mrb[0].mxu0 %v198
    %v634 = vpop.f32.mrb[0].mxu0
    %v635 = vadd.f32 %v595, %v634
    %v636 = vpop.f32.mrb[0].mxu0
    %v637 = vpop.f32.mrb[0].mxu0
    %v638 = vpop.f32.mrb[0].mxu0
    %639 = vdwg.mxu0
    %640 = vmatprep.subr.bf16.mxu0 0
    %641 = vmatpush1.bf16.msra.mxu0 %v466
    %642 = vmatprep.subr.bf16.mxu0 0
    %643 = vmatpush1.bf16.msra.mxu0 0
    %644 = vmatprep.subr.bf16.mxu0 0
    %645 = vmatpush1.bf16.msra.mxu0 0
    %646 = vmatprep.subr.bf16.mxu0 0
    %647 = vmatpush1.bf16.msra.mxu0 0
    %648 = vmatprep.subr.bf16.mxu0 0
    %649 = vmatpush1.bf16.msra.mxu0 0
    %650 = vmatprep.subr.bf16.mxu0 0
    %651 = vmatpush1.bf16.msra.mxu0 0
    %652 = vmatprep.subr.bf16.mxu0 0
    %653 = vmatpush1.bf16.msra.mxu0 0
    %654 = vmatprep.subr.bf16.mxu0 0
    %655 = vmatpush1.bf16.msra.mxu0 0
    %656 = vmatprep.subr.bf16.mxu0 0
    %657 = vmatpush1.bf16.msra.mxu0 0
    %658 = vmatprep.subr.bf16.mxu0 0
    %659 = vmatpush1.bf16.msra.mxu0 0
    %660 = vmatprep.subr.bf16.mxu0 0
    %661 = vmatpush1.bf16.msra.mxu0 0
    %662 = vmatprep.subr.bf16.mxu0 0
    %663 = vmatpush1.bf16.msra.mxu0 0
    %664 = vmatprep.subr.bf16.mxu0 0
    %665 = vmatpush1.bf16.msra.mxu0 0
    %666 = vmatprep.subr.bf16.mxu0 0
    %667 = vmatpush1.bf16.msra.mxu0 0
    %668 = vmatprep.subr.bf16.mxu0 0
    %669 = vmatpush1.bf16.msra.mxu0 0
    %670 = vmatprep.subr.bf16.mxu0 0
    %671 = vmatpush1.bf16.msra.mxu0 0
    %672 = vmatprep.mubr.bf16.mxu0 0
    %673 = vmatmul.mubr.bf16.gmra.mrb[0].mxu0 %v518
    %v674 = vpop.f32.mrb[0].mxu0
    %v675 = vadd.f32 %v635, %v674
    %v676 = vpop.f32.mrb[0].mxu0
    %v677 = vpop.f32.mrb[0].mxu0
    %v678 = vpop.f32.mrb[0].mxu0
    %679 = vdwg.mxu0
    %v680 = vtanh.pop %v675
    %v681 = vld [vmem:[%s3] sm:$0xff]
    %v682 = vld [vmem:[%s3 + $0x8] sm:$0xff]
    %v683 = vld [vmem:[%s3 + $0x10] sm:$0xff]
    %v684 = vld [vmem:[%s3 + $0x18] sm:$0xff]
    %v685 = vld [vmem:[%s3 + $0x20] sm:$0xff]
    %v686 = vld [vmem:[%s3 + $0x28] sm:$0xff]
    %v687 = vld [vmem:[%s3 + $0x30] sm:$0xff]
    %v688 = vld [vmem:[%s3 + $0x38] sm:$0xff]
    %v689 = vld [vmem:[%s3 + $0x40] sm:$0xff]
    %v690 = vld [vmem:[%s3 + $0x48] sm:$0xff]
    %v691 = vld [vmem:[%s3 + $0x50] sm:$0xff]
    %v692 = vld [vmem:[%s3 + $0x58] sm:$0xff]
    %v693 = vld [vmem:[%s3 + $0x60] sm:$0xff]
    %v694 = vld [vmem:[%s3 + $0x68] sm:$0xff]
    %v695 = vld [vmem:[%s3 + $0x70] sm:$0xff]
    %v696 = vld [vmem:[%s3 + $0x78] sm:$0xff]
    %v697 = vld [vmem:[%s4] sm:$0x1]
    %v699 = vlaneseq
    %v700 = vshrl.u32 %v699, 7
    %v701 = vsub.s32 0, %v700
    %v702 = vrot.slane %v697, %v701
    %704 = vmatprep.subr.mxu0 0.0
    %705 = vmatpush1.msra.mxu0 %v681
    %706 = vmatprep.subr.mxu0 0.0
    %707 = vmatpush1.msra.mxu0 %v682
    %708 = vmatprep.subr.mxu0 0.0
    %709 = vmatpush1.msra.mxu0 %v683
    %710 = vmatprep.subr.mxu0 0.0
    %711 = vmatpush1.msra.mxu0 %v684
    %712 = vmatprep.subr.mxu0 0.0
    %713 = vmatpush1.msra.mxu0 %v685
    %714 = vmatprep.subr.mxu0 0.0
    %715 = vmatpush1.msra.mxu0 %v686
    %716 = vmatprep.subr.mxu0 0.0
    %717 = vmatpush1.msra.mxu0 %v687
    %718 = vmatprep.subr.mxu0 0.0
    %719 = vmatpush1.msra.mxu0 %v688
    %720 = vmatprep.subr.mxu0 0.0
    %721 = vmatpush1.msra.mxu0 %v689
    %722 = vmatprep.subr.mxu0 0.0
    %723 = vmatpush1.msra.mxu0 %v690
    %724 = vmatprep.subr.mxu0 0.0
    %725 = vmatpush1.msra.mxu0 %v691
    %726 = vmatprep.subr.mxu0 0.0
    %727 = vmatpush1.msra.mxu0 %v692
    %728 = vmatprep.subr.mxu0 0.0
    %729 = vmatpush1.msra.mxu0 %v693
    %730 = vmatprep.subr.mxu0 0.0
    %731 = vmatpush1.msra.mxu0 %v694
    %732 = vmatprep.subr.mxu0 0.0
    %733 = vmatpush1.msra.mxu0 %v695
    %734 = vmatprep.subr.mxu0 0.0
    %735 = vmatpush1.msra.mxu0 %v696
    %736 = vmatprep.subr.mxu0 0.0
    %737 = vmatpush1.msra.mxu0 0.0
    %738 = vmatprep.subr.mxu0 0.0
    %739 = vmatpush1.msra.mxu0 0.0
    %740 = vmatprep.subr.mxu0 0.0
    %741 = vmatpush1.msra.mxu0 0.0
    %742 = vmatprep.subr.mxu0 0.0
    %743 = vmatpush1.msra.mxu0 0.0
    %744 = vmatprep.subr.mxu0 0.0
    %745 = vmatpush1.msra.mxu0 0.0
    %746 = vmatprep.subr.mxu0 0.0
    %747 = vmatpush1.msra.mxu0 0.0
    %748 = vmatprep.subr.mxu0 0.0
    %749 = vmatpush1.msra.mxu0 0.0
    %750 = vmatprep.subr.mxu0 0.0
    %751 = vmatpush1.msra.mxu0 0.0
    %752 = vmatprep.subr.mxu0 0.0
    %753 = vmatpush1.msra.mxu0 0.0
    %754 = vmatprep.subr.mxu0 0.0
    %755 = vmatpush1.msra.mxu0 0.0
    %756 = vmatprep.subr.mxu0 0.0
    %757 = vmatpush1.msra.mxu0 0.0
    %758 = vmatprep.subr.mxu0 0.0
    %759 = vmatpush1.msra.mxu0 0.0
    %760 = vmatprep.subr.mxu0 0.0
    %761 = vmatpush1.msra.mxu0 0.0
    %762 = vmatprep.subr.mxu0 0.0
    %763 = vmatpush1.msra.mxu0 0.0
    %764 = vmatprep.subr.mxu0 0.0
    %765 = vmatpush1.msra.mxu0 0.0
    %766 = vmatprep.subr.mxu0 0.0
    %767 = vmatpush1.msra.mxu0 0.0
    %768 = vmatprep.mubr.f32.mxu0 0.0
    %769 = vmatmul.mubr.f32.gmra.mrb[0].mxu0 %v680
    %v770 = vpop.f32.mrb[0].mxu0
    %v771 = vadd.f32 %v702, %v770
    %v772 = vpop.f32.mrb[0].mxu0
    %773 = vdwg.mxu0
    %vm774 = vcmask 80896
    %v775 = vsel %vm774, %v771, -inf
    %776 = vmax.xlane.f32.xlu0 %v775
    %v777 = vpop.xlane.xlu0 %776
    %v778 = vsub.f32 %v771, %v777
    %v779 = vmul.f32 %v778, 1.442695
    %v780 = vpow.pop %v779
    %v781 = vsel %vm774, %v780, 0.0
    %782 = vadd.xlane.f32.xlu0 %v781
    %v783 = vpop.xlane.xlu0 %782
    %v784 = vlog2.pop %v783
    %v785 = vmul.f32 %v784, 0.6931472
    %v786 = vsub.f32 %v778, %v785
    %787 = vst.msk [vmem:[#allocation5] sm:$0xff] %vm774, %v786
    // Predicated region
    $region26: #{netfull_forward.1} parent=1 // pred_check
      _
    $region27: #{netfull_forward.1} parent=1 // pred_check_branch
      %789 = sbr.rel (0) target = $region29
    $region28: #{netfull_forward.1} parent=1 // pred_region
      %s791 = ssub.s32 128, 32
      %792 = vsyncadd [#allocation4], %s791
      %s793 = sshll.u32 [#allocation5], 4
      %s794 = int_to_ptr.vmem [resolvable:$true] %s793
      %799 = dma.vmem_to_hbm [thread:$0]  %s794, 32, %s5, [#allocation4], 32, 32, 2
    $region29: #{netfull_forward.1} parent=1 // pred_fallthru
      _
    // Predicated region
    $region30: #{netfull_forward.1} parent=1 // pred_check
      _
    $region31: #{netfull_forward.1} parent=1 // pred_check_branch
      %801 = sbr.rel (0) target = $region33
    $region32: #{netfull_forward.1} parent=1 // pred_region
      %802 = dma.done [#allocation4], 128
    $region33: #{netfull_forward.1} parent=1 // pred_fallthru
      _
    %803 = vsyncpa [#allocation3], 1
    %804 = vsyncpa [#allocation4], 1

</llo_original>
